<compile_context>
chip_gen: v7x
topology: tpu7x:2x2x1
jax: 0.10.0
libtpu: 0.0.40
codegen_flags: <defaults>
</compile_context>

<pallas_src>
import math

import jax
import jax.numpy as jnp
from jax import lax
from jax.experimental import pallas as pl
from jax.experimental.pallas import tpu as pltpu


def _qk_mask_kernel(q_ref, k_ref, qk_ref, mask_out_ref):
    # q_ref: (NH, TQ, D), k_ref: (NH, TK, D)
    # qk_ref / mask_out_ref: (NH, TQ, TK)
    nh, tq, d = q_ref.shape
    tk = k_ref.shape[1]
    scale = 1.0 / math.sqrt(d)

    # Rebuild the mask tile from absolute row/col positions (VPU only).
    # Values: 1.0 strictly above the diagonal, +inf on/below it -- identical to
    # 1.0 / triu(ones, diagonal=1).  The reference's masked_fill(==0, -10000) is
    # dead code (no zeros survive the reciprocal) and is dropped.
    q0 = pl.program_id(1) * tq
    k0 = pl.program_id(2) * tk
    row = lax.broadcasted_iota(jnp.int32, (tq, tk), 0) + q0
    col = lax.broadcasted_iota(jnp.int32, (tq, tk), 1) + k0
    m = jnp.where(col > row, jnp.float32(1.0), jnp.float32(jnp.inf))

    q = q_ref[...]
    k = k_ref[...]

    # Tiny tiles: a (tq x d) @ (d x tk) matmul with d<=32, tq/tk<=64 uses <1% of the
    # MXU and is push/drain bound -> compute on the VPU instead (f32 accumulation).
    vpu_intermediate_bytes = nh * tq * (-(-tk // 8) * 8) * 128 * 4
    if d <= 32 and tq <= 64 and tk <= 64 and vpu_intermediate_bytes <= (2 << 20):
        s = jnp.sum(
            q[:, :, None, :].astype(jnp.float32) * k[:, None, :, :].astype(jnp.float32),
            axis=-1,
        )
    else:
        s = jnp.einsum("bqd,bkd->bqk", q, k, preferred_element_type=jnp.float32)

    # qk * mask reproduces PyTorch semantics exactly: strict-upper -> scaled score,
    # lower+diag -> score * inf (i.e. +/-inf, or NaN when the raw score is exactly 0).
    qk_ref[...] = ((s * scale) * m[None, :, :]).astype(qk_ref.dtype)
    # Second output: the full-size mask, written in the same pipelined pass.
    mask_out_ref[...] = jnp.broadcast_to(m[None, :, :], mask_out_ref.shape).astype(
        mask_out_ref.dtype
    )


def _vmem_block_bytes(shape, itemsize):
    """VMEM footprint of one block, accounting for (8, 128) tile padding."""
    shape = tuple(int(s) for s in shape)
    if len(shape) == 1:
        shape = (1,) + shape
    lead = 1
    for s in shape[:-2]:
        lead *= s
    sub = -(-shape[-2] // 8) * 8
    lane = -(-shape[-1] // 128) * 128
    return lead * sub * lane * itemsize


def _vmem_budget_and_limit():
    """Generation-aware block budget + explicit compiler VMEM limit."""
    try:
        cap = int(getattr(pltpu.get_tpu_info(), "vmem_capacity_bytes", 0)) or (64 << 20)
    except Exception:
        cap = 64 << 20  # conservative fallback: v7x per-TensorCore VMEM
    # ~48 MiB of double-buffered blocks on v5e/v6e (128 MiB physical),
    # ~44 MiB on v7x (64 MiB physical); keep headroom for compiler scratch.
    budget = min(int(cap * 0.7), 48 << 20)
    limit = max(32 << 20, min(cap - (8 << 20), budget + (16 << 20)))
    return budget, limit


def _plan_tiles(bh, s, d, in_itemsize, out_itemsize, budget):
    """Pick (heads-per-step NH, q-tile tq, k-tile tk).

    * tk is a multiple of 128 when S allows it -> lane-dense qk/mask stores.
    * tq is sublane-aligned (multiple of 8) when S allows it.
    * NH capped so the BH grid axis keeps >= min(4, BH) steps (pipelining +
      megacore sharding), then maximised under the double-buffered VMEM budget.
    """
    tk = next((t for t in (512, 256, 128) if s % t == 0), s)
    tq_cands = [t for t in (512, 256, 128, 64, 32, 16, 8) if s % t == 0] or [s]

    def step_bytes(nh, tq_):
        per = (
            _vmem_block_bytes((nh, tq_, d), in_itemsize)
            + _vmem_block_bytes((nh, tk, d), in_itemsize)
            + 2 * _vmem_block_bytes((nh, tq_, tk), out_itemsize)  # qk + mask outputs
        )
        return 2 * per  # every block is double-buffered by the pipeline

    tq = next((t for t in tq_cands if step_bytes(1, t) <= budget), tq_cands[-1])

    max_nh = max(1, bh // min(4, bh))  # keep >= min(4, BH) steps along BH
    nh = 1
    for cand in range(max_nh, 0, -1):
        if bh % cand == 0 and step_bytes(cand, tq) <= budget:
            nh = cand
            break
    return nh, tq, tk
    # TODO(synk): for ragged S (not a multiple of 128) we fall back to full-S blocks;
    # extremely large ragged S could still exceed the VMEM limit.


def model_forward(q, k, v):
    # v is accepted but unused, exactly as in the reference PyTorch module.
    del v
    B, H, S, D = q.shape
    BH = B * H
    out_dtype = jnp.promote_types(q.dtype, k.dtype)
    in_itemsize = jnp.dtype(q.dtype).itemsize
    out_itemsize = jnp.dtype(out_dtype).itemsize

    qf = q.reshape(BH, S, D)
    kf = k.reshape(BH, S, D)

    budget, vmem_limit = _vmem_budget_and_limit()
    nh, tq, tk = _plan_tiles(BH, S, D, in_itemsize, out_itemsize, budget)
    grid = (BH // nh, S // tq, S // tk)

    # TODO(synk): for S < 128 the output minor dim (= S) forces masked vst stores; the
    # flat (.., 128) layout fix needs an in-kernel relayout that costs more than it saves
    # at these tiny shapes, so it is intentionally not applied.  For S >= 128 the tk tile
    # (multiple of 128) already gives lane-dense stores.

    cost = pl.CostEstimate(
        flops=2 * BH * S * S * D + 2 * BH * S * S,
        transcendentals=0,
        bytes_accessed=2 * BH * S * D * in_itemsize + 2 * BH * S * S * out_itemsize,
    )

    qk_flat, mask_flat = pl.pallas_call(
        _qk_mask_kernel,
        out_shape=(
            jax.ShapeDtypeStruct((BH, S, S), out_dtype),
            jax.ShapeDtypeStruct((BH, S, S), out_dtype),
        ),
        grid=grid,
        in_specs=[
            pl.BlockSpec((nh, tq, D), lambda i, qi, ki: (i, qi, 0)),
            pl.BlockSpec((nh, tk, D), lambda i, qi, ki: (i, ki, 0)),
        ],
        out_specs=(
            pl.BlockSpec((nh, tq, tk), lambda i, qi, ki: (i, qi, ki)),
            pl.BlockSpec((nh, tq, tk), lambda i, qi, ki: (i, qi, ki)),
        ),
        compiler_params=pltpu.CompilerParams(
            dimension_semantics=("parallel", "parallel", "parallel"),
            vmem_limit_bytes=vmem_limit,
        ),
        cost_estimate=cost,
    )(qf, kf)

    return qk_flat.reshape(B, H, S, S), mask_flat.reshape(B, H, S, S)


if __name__ == "__main__":
    key = jax.random.PRNGKey(0)
    kq, kk, kv = jax.random.split(key, 3)
    B, H, S, D = 2, 2, 8, 16
    q = jax.random.normal(kq, (B, H, S, D), dtype=jnp.float32)
    k = jax.random.normal(kk, (B, H, S, D), dtype=jnp.float32)
    v = jax.random.normal(kv, (B, H, S, D), dtype=jnp.float32)

    out_qk, out_mask = model_forward(q, k, v)
    jax.block_until_ready((out_qk, out_mask))

    # Light correctness check on the finite (strictly-upper) part and on the mask.
    ref_qk = jnp.einsum("bhqd,bhkd->bhqk", q, k, preferred_element_type=jnp.float32) / math.sqrt(D)
    upper = jnp.triu(jnp.ones((S, S), dtype=bool), k=1)
    max_err = float(jnp.max(jnp.abs(jnp.where(upper, out_qk - ref_qk, 0.0))))
    assert max_err < 1e-3, f"qk mismatch on unmasked entries: {max_err}"
    mask_ok = bool(jnp.all(jnp.where(upper, out_mask == 1.0, jnp.isposinf(out_mask))))
    assert mask_ok, "mask values mismatch"

    print("KERNEL_OK")
</pallas_src>

<mosaic_0001>
module attributes {stable_mosaic.version = 11 : i64} {
  func.func @_qk_mask_kernel(%arg0: i32, %arg1: i32, %arg2: i32, %arg3: memref<1x8x16xf32, #tpu.memory_space<vmem>>, %arg4: memref<1x8x16xf32, #tpu.memory_space<vmem>>, %arg5: memref<1x8x8xf32, #tpu.memory_space<vmem>>, %arg6: memref<1x8x8xf32, #tpu.memory_space<vmem>>) attributes {dimension_semantics = [#tpu.dimension_semantics<parallel>, #tpu.dimension_semantics<parallel>, #tpu.dimension_semantics<parallel>], iteration_bounds = array<i64: 4, 1, 1>, scalar_prefetch = 0 : i64, scratch_operands = 0 : i64, tpu.core_type = #tpu.core_type<tc>, window_params = [{transform_indices = @transform_0, window_bounds = array<i64: 1, 8, 16>}, {transform_indices = @transform_1, window_bounds = array<i64: 1, 8, 16>}, {transform_indices = @transform_2, window_bounds = array<i64: 1, 8, 8>}, {transform_indices = @transform_3, window_bounds = array<i64: 1, 8, 8>}]} {
    %c8_i32 = arith.constant 8 : i32
    %0 = arith.muli %arg1, %c8_i32 : i32
    %c8_i32_0 = arith.constant 8 : i32
    %1 = arith.muli %arg2, %c8_i32_0 : i32
    %2 = tpu.iota {dimensions = array<i32: 0>} : vector<8x8xi32>
    %3 = vector.broadcast %0 : i32 to vector<8x8xi32>
    %4 = arith.addi %2, %3 : vector<8x8xi32>
    %5 = tpu.iota {dimensions = array<i32: 1>} : vector<8x8xi32>
    %6 = vector.broadcast %1 : i32 to vector<8x8xi32>
    %7 = arith.addi %5, %6 : vector<8x8xi32>
    %8 = arith.cmpi sgt, %7, %4 : vector<8x8xi32>
    %cst = arith.constant 1.000000e+00 : f32
    %cst_1 = arith.constant 0x7F800000 : f32
    %9 = vector.broadcast %cst : f32 to vector<8x8xf32>
    %10 = vector.broadcast %cst_1 : f32 to vector<8x8xf32>
    %11 = arith.select %8, %9, %10 : vector<8x8xi1>, vector<8x8xf32>
    %c0 = arith.constant 0 : index
    %c0_2 = arith.constant 0 : index
    %c0_3 = arith.constant 0 : index
    %12 = vector.load %arg3[%c0, %c0_2, %c0_3] : memref<1x8x16xf32, #tpu.memory_space<vmem>>, vector<1x8x16xf32>
    %c0_4 = arith.constant 0 : index
    %c0_5 = arith.constant 0 : index
    %c0_6 = arith.constant 0 : index
    %13 = vector.load %arg4[%c0_4, %c0_5, %c0_6] : memref<1x8x16xf32, #tpu.memory_space<vmem>>, vector<1x8x16xf32>
    %14 = vector.shape_cast %12 : vector<1x8x16xf32> to vector<1x8x1x16xf32>
    %15 = vector.shape_cast %13 : vector<1x8x16xf32> to vector<1x1x8x16xf32>
    %16 = vector.broadcast %14 : vector<1x8x1x16xf32> to vector<1x8x8x16xf32>
    %17 = vector.broadcast %15 : vector<1x1x8x16xf32> to vector<1x8x8x16xf32>
    %18 = arith.mulf %16, %17 : vector<1x8x8x16xf32>
    %cst_7 = arith.constant dense<0.000000e+00> : vector<1x8x8xf32>
    %19 = vector.multi_reduction <add>, %18, %cst_7 [3] : vector<1x8x8x16xf32> to vector<1x8x8xf32>
    %cst_8 = arith.constant 2.500000e-01 : f32
    %20 = vector.broadcast %cst_8 : f32 to vector<1x8x8xf32>
    %21 = arith.mulf %19, %20 : vector<1x8x8xf32>
    %22 = vector.shape_cast %11 : vector<8x8xf32> to vector<1x8x8xf32>
    %23 = arith.mulf %21, %22 : vector<1x8x8xf32>
    %c0_9 = arith.constant 0 : index
    %c0_10 = arith.constant 0 : index
    %c0_11 = arith.constant 0 : index
    %24 = vector.load %arg5[%c0_9, %c0_10, %c0_11] : memref<1x8x8xf32, #tpu.memory_space<vmem>>, vector<1x8x8xf32>
    tpu.vector_store %arg5[%c0_9, %c0_10, %c0_11], %23 {strides = array<i32>} : memref<1x8x8xf32, #tpu.memory_space<vmem>>, vector<1x8x8xf32>,
    %25 = vector.shape_cast %11 : vector<8x8xf32> to vector<1x8x8xf32>
    %c0_12 = arith.constant 0 : index
    %c0_13 = arith.constant 0 : index
    %c0_14 = arith.constant 0 : index
    %26 = vector.load %arg6[%c0_12, %c0_13, %c0_14] : memref<1x8x8xf32, #tpu.memory_space<vmem>>, vector<1x8x8xf32>
    tpu.vector_store %arg6[%c0_12, %c0_13, %c0_14], %25 {strides = array<i32>} : memref<1x8x8xf32, #tpu.memory_space<vmem>>, vector<1x8x8xf32>,
    return
  }
  func.func @transform_0(%arg0: i32, %arg1: i32, %arg2: i32) -> (i32, i32, i32) {
    %c0_i32 = arith.constant 0 : i32
    %c0_i32_0 = arith.constant 0 : i32
    return %arg0, %arg1, %c0_i32 : i32, i32, i32
  }
  func.func @transform_1(%arg0: i32, %arg1: i32, %arg2: i32) -> (i32, i32, i32) {
    %c0_i32 = arith.constant 0 : i32
    %c0_i32_0 = arith.constant 0 : i32
    return %arg0, %arg2, %c0_i32 : i32, i32, i32
  }
  func.func @transform_2(%arg0: i32, %arg1: i32, %arg2: i32) -> (i32, i32, i32) {
    %c0_i32 = arith.constant 0 : i32
    return %arg0, %arg1, %arg2 : i32, i32, i32
  }
  func.func @transform_3(%arg0: i32, %arg1: i32, %arg2: i32) -> (i32, i32, i32) {
    %c0_i32 = arith.constant 0 : i32
    return %arg0, %arg1, %arg2 : i32, i32, i32
  }
}

</mosaic_0001>

<llo_original>
// kernel: tpu_custom_call.1
$region0: #{tpu_custom_call.1}
  #allocation0 [shape = 'u32[]', space=smem, size = 0x4, offset = 0x4, fixed_abs, tag = 'smem constant byte address 0x4 - core index']
  #allocation1 [shape = 'u32[144,128]{1,0:T(1,128)}', space=vmem, size = 0x12000, scoped, tag = 'internal scratch']
  %s0 = inlined_call_operand.hbm [shape: f32[4,8,16], index: 0, kind: input, shape index: {}]
  %s1 = inlined_call_operand.hbm [shape: f32[4,8,16], index: 1, kind: input, shape index: {}]
  %s2 = inlined_call_operand.hbm [shape: f32[4,8,8], index: 2, kind: output, shape index: {0}]
  %s3 = inlined_call_operand.hbm [shape: f32[4,8,8], index: 3, kind: output, shape index: {1}]
  %4 = xla_tuple %s2, %s3
  %s5 = sld [smem:[#allocation0]]
  $region57: #{tpu_custom_call.1} parent=0
    _
  %s7 = ssub.s32 1, %s5
  %s8 = scalar_select 0, %s7, %s5
  $region1: #{tpu_custom_call.1} parent=0
    #allocation2 [shape = 'u8[8192]{0}', space=vmem, size = 0x2000, scoped, tag = 'input window, operand 0']
    #allocation3 [shape = 's32[2]{0}', space=sflag, size = 0x8, scoped, tag = 'scoped memory for tpu_custom_call.1']
    #allocation4 [shape = 's32[2]{0}', space=sflag, size = 0x8, scoped, tag = 'scoped memory for tpu_custom_call.1']
    #allocation5 [shape = 'u8[8192]{0}', space=vmem, size = 0x2000, scoped, tag = 'input window, operand 1']
    #allocation6 [shape = 's32[2]{0}', space=sflag, size = 0x8, scoped, tag = 'scoped memory for tpu_custom_call.1']
    #allocation7 [shape = 'u8[8192]{0}', space=vmem, size = 0x2000, scoped, tag = 'output window, operand 0']
    #allocation8 [shape = 'u8[8192]{0}', space=vmem, size = 0x2000, scoped, tag = 'output window, operand 1']
    #allocation9 [shape = 's32[2]{0}', space=sflag, size = 0x8, scoped, tag = 'scoped memory for tpu_custom_call.1']
    %9 = vsyncpa [#allocation3], 0
    %s10 = scalar_lea.sflag [#allocation3], 1
    %11 = vsyncpa %s10, 0
    %12 = vsyncpa [#allocation6], 0
    %s13 = scalar_lea.sflag [#allocation6], 1
    %14 = vsyncpa %s13, 0
    %15 = vsyncpa [#allocation4], 0
    %s16 = scalar_lea.sflag [#allocation4], 1
    %17 = vsyncpa %s16, 0
    %18 = vsyncpa [#allocation9], 0
    %s19 = scalar_lea.sflag [#allocation9], 1
    %20 = vsyncpa %s19, 0
    loop: start=0, step=1, limit=6
    $region2: #{tpu_custom_call.1} parent=1 // loop_pre_header
      _
    $region3: #{tpu_custom_call.1} parent=1 // loop_header
      %s22 = sphi 0, %s26
      %p23 = scmp.ge.s32.totalorder %s22, 6
      %s29 = sphi 0, %s48
      %s30 = sphi 0, %s44
      %s31 = sphi 0, %s40
      %s32 = sphi 0, %s29
      %s33 = sphi 0, %s30
      %s34 = sphi 0, %s31
      %s35 = sphi 0, %s32
      %s36 = sphi 0, %s33
      %s37 = sphi 0, %s34
      %s53 = sphi 0, %s55
      %s56 = sphi 0, %s53
      %s57 = sphi 0, %s56
      %s73 = sphi 0, %s57
      %s81 = sphi 0, %s83
      %s84 = sphi 0, %s81
      %s85 = sphi 0, %s84
      %s101 = sphi 0, %s85
      %s111 = sphi 0, %s113
      %s114 = sphi 0, %s111
      %s115 = sphi 0, %s114
      %s131 = sphi 0, %s115
      %s141 = sphi 0, %s143
      %s144 = sphi 0, %s141
      %s145 = sphi 0, %s144
      %s161 = sphi 0, %s145
    $region4: #{tpu_custom_call.1} parent=1 // loop_header_branch
      %25 = sbr.rel (%p23) target = $region8
    $region5: #{tpu_custom_call.1} parent=1 // loop_body
      %s27 = ssub.s32 %s22, 1
      %s28 = ssub.s32 %s22, 2
      %s38 = sadd.s32 1, %s31
      %p39 = scmp.ge.s32.totalorder %s38, 1
      %s40 = scalar_select %p39, 0, %s38
      %s41 = sadd.s32 1, %s30
      %s42 = scalar_select %p39, %s41, %s30
      %p43 = scmp.ge.s32.totalorder %s42, 1
      %s44 = scalar_select %p43, 0, %s42
      %s45 = sadd.s32 1, %s29
      %s46 = scalar_select %p43, %s45, %s29
      %p47 = scmp.ge.s32.totalorder %s46, 4
      %s48 = scalar_select %p47, 0, %s46
      %s49 = ssub.s32 %s29, %s48
      %s50 = ssub.s32 %s30, %s44
      %s51 = sor.u32 %s49, %s50
      %p52 = scmp.eq.s32.totalorder %s51, 0
      %s54 = sadd.s32 %s53, 1
      %s55 = scalar_select %p52, %s53, %s54
      %p58 = pneg %p52
      %p59 = scmp.eq.s32.totalorder %s22, 3
      %p60 = por %p58, %p59
      %p61 = scmp.ne.s32.totalorder %s53, %s56
      %p62 = scmp.eq.s32.totalorder %s22, 0
      %p63 = por %p61, %p62
      %p64 = scmp.ne.s32.totalorder %s53, %s56
      %p65 = scmp.eq.s32.totalorder %s27, 3
      %p66 = por %p64, %p65
      %p67 = scmp.ne.s32.totalorder %s56, %s57
      %p68 = scmp.eq.s32.totalorder %s27, 0
      %p69 = por %p67, %p68
      %p70 = scmp.ne.s32.totalorder %s56, %s57
      %p71 = scmp.eq.s32.totalorder %s28, 3
      %p72 = por %p70, %p71
      %p74 = scmp.ne.s32.totalorder %s57, %s73
      %p75 = scmp.eq.s32.totalorder %s28, 0
      %p76 = por %p74, %p75
      %s77 = ssub.s32 %s29, %s48
      %s78 = ssub.s32 %s31, %s40
      %s79 = sor.u32 %s77, %s78
      %p80 = scmp.eq.s32.totalorder %s79, 0
      %s82 = sadd.s32 %s81, 1
      %s83 = scalar_select %p80, %s81, %s82
      %p86 = pneg %p80
      %p87 = scmp.eq.s32.totalorder %s22, 3
      %p88 = por %p86, %p87
      %p89 = scmp.ne.s32.totalorder %s81, %s84
      %p90 = scmp.eq.s32.totalorder %s22, 0
      %p91 = por %p89, %p90
      %p92 = scmp.ne.s32.totalorder %s81, %s84
      %p93 = scmp.eq.s32.totalorder %s27, 3
      %p94 = por %p92, %p93
      %p95 = scmp.ne.s32.totalorder %s84, %s85
      %p96 = scmp.eq.s32.totalorder %s27, 0
      %p97 = por %p95, %p96
      %p98 = scmp.ne.s32.totalorder %s84, %s85
      %p99 = scmp.eq.s32.totalorder %s28, 3
      %p100 = por %p98, %p99
      %p102 = scmp.ne.s32.totalorder %s85, %s101
      %p103 = scmp.eq.s32.totalorder %s28, 0
      %p104 = por %p102, %p103
      %s105 = ssub.s32 %s29, %s48
      %s106 = ssub.s32 %s30, %s44
      %s107 = sor.u32 %s105, %s106
      %s108 = ssub.s32 %s31, %s40
      %s109 = sor.u32 %s107, %s108
      %p110 = scmp.eq.s32.totalorder %s109, 0
      %s112 = sadd.s32 %s111, 1
      %s113 = scalar_select %p110, %s111, %s112
      %p116 = pneg %p110
      %p117 = scmp.eq.s32.totalorder %s22, 3
      %p118 = por %p116, %p117
      %p119 = scmp.ne.s32.totalorder %s111, %s114
      %p120 = scmp.eq.s32.totalorder %s22, 0
      %p121 = por %p119, %p120
      %p122 = scmp.ne.s32.totalorder %s111, %s114
      %p123 = scmp.eq.s32.totalorder %s27, 3
      %p124 = por %p122, %p123
      %p125 = scmp.ne.s32.totalorder %s114, %s115
      %p126 = scmp.eq.s32.totalorder %s27, 0
      %p127 = por %p125, %p126
      %p128 = scmp.ne.s32.totalorder %s114, %s115
      %p129 = scmp.eq.s32.totalorder %s28, 3
      %p130 = por %p128, %p129
      %p132 = scmp.ne.s32.totalorder %s115, %s131
      %p133 = scmp.eq.s32.totalorder %s28, 0
      %p134 = por %p132, %p133
      %s135 = ssub.s32 %s29, %s48
      %s136 = ssub.s32 %s30, %s44
      %s137 = sor.u32 %s135, %s136
      %s138 = ssub.s32 %s31, %s40
      %s139 = sor.u32 %s137, %s138
      %p140 = scmp.eq.s32.totalorder %s139, 0
      %s142 = sadd.s32 %s141, 1
      %s143 = scalar_select %p140, %s141, %s142
      %p146 = pneg %p140
      %p147 = scmp.eq.s32.totalorder %s22, 3
      %p148 = por %p146, %p147
      %p149 = scmp.ne.s32.totalorder %s141, %s144
      %p150 = scmp.eq.s32.totalorder %s22, 0
      %p151 = por %p149, %p150
      %p152 = scmp.ne.s32.totalorder %s141, %s144
      %p153 = scmp.eq.s32.totalorder %s27, 3
      %p154 = por %p152, %p153
      %p155 = scmp.ne.s32.totalorder %s144, %s145
      %p156 = scmp.eq.s32.totalorder %s27, 0
      %p157 = por %p155, %p156
      %p158 = scmp.ne.s32.totalorder %s144, %s145
      %p159 = scmp.eq.s32.totalorder %s28, 3
      %p160 = por %p158, %p159
      %p162 = scmp.ne.s32.totalorder %s145, %s161
      %p163 = scmp.eq.s32.totalorder %s28, 0
      %p164 = por %p162, %p163
      %p165 = scmp.le.s32.totalorder 1, %s22
      %p166 = scmp.lt.s32.totalorder %s22, 5
      %p167 = pnand %p165, %p166
      %p168 = pneg %p167
      // Predicated region
      $region9: #{tpu_custom_call.1} parent=5 // pred_check
        _
      $region10: #{tpu_custom_call.1} parent=5 // pred_check_branch
        %170 = sbr.rel (%p167) target = $region12
      $region11: #{tpu_custom_call.1} parent=5 // pred_region
        %s171 = ssub.s32 %s22, 1
      $region12: #{tpu_custom_call.1} parent=5 // pred_fallthru
        _
      %p172 = scmp.lt.s32.totalorder %s22, 4
      // Predicated region
      $region13: #{tpu_custom_call.1} parent=5 // pred_check
        %p173 = pneg %p172
      $region14: #{tpu_custom_call.1} parent=5 // pred_check_branch
        %175 = sbr.rel (%p173) target = $region16
      $region15: #{tpu_custom_call.1} parent=5 // pred_region
        // Predicated region
        $region17: #{tpu_custom_call.1} parent=15 // pred_check
          %p176 = pneg %p63
        $region18: #{tpu_custom_call.1} parent=15 // pred_check_branch
          %178 = sbr.rel (%p176) target = $region20
        $region19: #{tpu_custom_call.1} parent=15 // pred_region
          %s179 = sand.u32 %s53, 1
          %s180 = scalar_lea.sflag [#allocation3], %s179
          %s181 = sand.u32 %s53, 1
          %s182 = smul.addr %s181, 8
          %s183 = scalar_lea.vmem [#allocation2], %s182
          %s185 = ssub.s32 128, 128
          %186 = vsyncadd %s180, %s185
          %s187 = sadd.s32 %s30, %s29
          %s188 = smul.addr %s187, 128
          %s189 = scalar_lea.hbm %s0, %s188
          %s191 = sshll.u32 %s183, 4
          %s192 = int_to_ptr.vmem [resolvable:$true] %s191
          %194 = dma.hbm_to_vmem [thread:$0]  %s189, 128, %s192, %s180
        $region20: #{tpu_custom_call.1} parent=15 // pred_fallthru
          _
        // Predicated region
        $region21: #{tpu_custom_call.1} parent=15 // pred_check
          %p195 = pneg %p91
        $region22: #{tpu_custom_call.1} parent=15 // pred_check_branch
          %197 = sbr.rel (%p195) target = $region24
        $region23: #{tpu_custom_call.1} parent=15 // pred_region
          %s198 = sand.u32 %s81, 1
          %s199 = scalar_lea.sflag [#allocation6], %s198
          %s200 = sand.u32 %s81, 1
          %s201 = smul.addr %s200, 8
          %s202 = scalar_lea.vmem [#allocation5], %s201
          %s204 = ssub.s32 128, 128
          %205 = vsyncadd %s199, %s204
          %s206 = sadd.s32 %s31, %s29
          %s207 = smul.addr %s206, 128
          %s208 = scalar_lea.hbm %s1, %s207
          %s210 = sshll.u32 %s202, 4
          %s211 = int_to_ptr.vmem [resolvable:$true] %s210
          %213 = dma.hbm_to_vmem [thread:$0]  %s208, 128, %s211, %s199
        $region24: #{tpu_custom_call.1} parent=15 // pred_fallthru
          _
      $region16: #{tpu_custom_call.1} parent=5 // pred_fallthru
        _
      %p214 = scmp.le.s32.totalorder 1, %s22
      %p215 = scmp.lt.s32.totalorder %s22, 5
      %p216 = pnand %p214, %p215
      %p217 = pneg %p216
      // Predicated region
      $region25: #{tpu_custom_call.1} parent=5 // pred_check
        _
      $region26: #{tpu_custom_call.1} parent=5 // pred_check_branch
        %219 = sbr.rel (%p216) target = $region28
      $region27: #{tpu_custom_call.1} parent=5 // pred_region
        %s220 = ssub.s32 %s22, 1
        %s221 = sand.u32 %s56, 1
        %s222 = scalar_lea.sflag [#allocation3], %s221
        %s223 = sand.u32 %s56, 1
        %s224 = smul.addr %s223, 8
        %s225 = scalar_lea.vmem [#allocation2], %s224
        // Predicated region
        $region29: #{tpu_custom_call.1} parent=27 // pred_check
          %p226 = pneg %p69
        $region30: #{tpu_custom_call.1} parent=27 // pred_check_branch
          %228 = sbr.rel (%p226) target = $region32
        $region31: #{tpu_custom_call.1} parent=27 // pred_region
          %229 = dma.done %s222, 128
        $region32: #{tpu_custom_call.1} parent=27 // pred_fallthru
          _
        %s230 = sand.u32 %s84, 1
        %s231 = scalar_lea.sflag [#allocation6], %s230
        %s232 = sand.u32 %s84, 1
        %s233 = smul.addr %s232, 8
        %s234 = scalar_lea.vmem [#allocation5], %s233
        // Predicated region
        $region33: #{tpu_custom_call.1} parent=27 // pred_check
          %p235 = pneg %p97
        $region34: #{tpu_custom_call.1} parent=27 // pred_check_branch
          %237 = sbr.rel (%p235) target = $region36
        $region35: #{tpu_custom_call.1} parent=27 // pred_region
          %238 = dma.done %s231, 128
        $region36: #{tpu_custom_call.1} parent=27 // pred_fallthru
          _
        %s239 = sand.u32 %s56, 1
        %s240 = scalar_lea.sflag [#allocation3], %s239
        %s241 = sand.u32 %s56, 1
        %s242 = smul.addr %s241, 8
        %s243 = scalar_lea.vmem [#allocation2], %s242
        %p244 = pneg %p69
        %p245 = pneg %p66
        %s246 = sand.u32 %s84, 1
        %s247 = scalar_lea.sflag [#allocation6], %s246
        %s248 = sand.u32 %s84, 1
        %s249 = smul.addr %s248, 8
        %s250 = scalar_lea.vmem [#allocation5], %s249
        %p251 = pneg %p97
        %p252 = pneg %p94
        %p253 = pneg %p127
        %p254 = pneg %p124
        %s255 = sand.u32 %s114, 1
        %s256 = scalar_lea.sflag [#allocation4], %s255
        %s257 = sand.u32 %s114, 1
        %s258 = smul.addr %s257, 8
        %s259 = scalar_lea.vmem [#allocation7], %s258
        %p260 = pneg %p157
        %p261 = pneg %p154
        %s262 = sand.u32 %s144, 1
        %s263 = scalar_lea.sflag [#allocation9], %s262
        %s264 = sand.u32 %s144, 1
        %s265 = smul.addr %s264, 8
        %s266 = scalar_lea.vmem [#allocation8], %s265
        %s267 = smul.u32 %s33, 8
        %s268 = smul.u32 %s34, 8
        %v269 = vlaneseq
        %v270 = vshrl.u32 %v269, 7
        %v271 = vstv %s267
        %v272 = vadd.s32 %v270, %v271
        %v273 = vlaneseq
        %v274 = vand.u32 %v273, 127
        %v275 = vstv %s268
        %v276 = vadd.s32 %v274, %v275
        %vm277 = vcmp.gt.s32.totalorder %v276, %v272
        %v278 = vsel %vm277, 1.0, inf
        %v279 = vld [vmem:[%s225] sm:$0xff]
        %v280 = vld [vmem:[%s234] sm:$0xff]
        %v282 = vcombine.high %v279, %v279
        %v284 = vunpack.c.l.s4 1966171168
        %v285 = vunpack.c.0.s8 %v284
        %v286 = vlaneseq
        %v287 = vshrl.u32 %v286, 7
        %v288 = vsub.s32 %v285, %v287
        %v289 = vrot.slane %v279, %v288
        %v291 = vunpack.c.l.s4 1966171168
        %v292 = vunpack.c.0.s8 %v291
        %v293 = vlaneseq
        %v294 = vshrl.u32 %v293, 7
        %v295 = vsub.s32 %v292, %v294
        %v296 = vrot.slane %v282, %v295
        %v297 = vcombine.high %v289, %v289
        %v298 = vcombine.high %v296, %v296
        %v300 = vunpack.c.l.s4 1966171168
        %v301 = vunpack.c.0.s8 %v300
        %v302 = vlaneseq
        %v303 = vshrl.u32 %v302, 7
        %v304 = vsub.s32 %v301, %v303
        %v305 = vrot.slane %v289, %v304
        %v307 = vunpack.c.l.s4 1966171168
        %v308 = vunpack.c.0.s8 %v307
        %v309 = vlaneseq
        %v310 = vshrl.u32 %v309, 7
        %v311 = vsub.s32 %v308, %v310
        %v312 = vrot.slane %v296, %v311
        %v314 = vunpack.c.l.s4 1966171168
        %v315 = vunpack.c.0.s8 %v314
        %v316 = vlaneseq
        %v317 = vshrl.u32 %v316, 7
        %v318 = vsub.s32 %v315, %v317
        %v319 = vrot.slane %v297, %v318
        %v321 = vunpack.c.l.s4 1966171168
        %v322 = vunpack.c.0.s8 %v321
        %v323 = vlaneseq
        %v324 = vshrl.u32 %v323, 7
        %v325 = vsub.s32 %v322, %v324
        %v326 = vrot.slane %v298, %v325
        %v327 = vcombine.high %v305, %v305
        %v328 = vcombine.high %v312, %v312
        %v329 = vcombine.high %v319, %v319
        %v330 = vcombine.high %v326, %v326
        %v331 = vlaneseq
        %v332 = vshrl.u32 %v331, 7
        %v333 = vsub.s32 0, %v332
        %v334 = vrot.slane %v305, %v333
        %v335 = vlaneseq
        %v336 = vshrl.u32 %v335, 7
        %v337 = vsub.s32 0, %v336
        %v338 = vrot.slane %v319, %v337
        %v339 = vlaneseq
        %v340 = vshrl.u32 %v339, 7
        %v341 = vsub.s32 0, %v340
        %v342 = vrot.slane %v327, %v341
        %v343 = vlaneseq
        %v344 = vshrl.u32 %v343, 7
        %v345 = vsub.s32 0, %v344
        %v346 = vrot.slane %v329, %v345
        %v347 = vlaneseq
        %v348 = vshrl.u32 %v347, 7
        %v349 = vsub.s32 0, %v348
        %v350 = vrot.slane %v312, %v349
        %v351 = vlaneseq
        %v352 = vshrl.u32 %v351, 7
        %v353 = vsub.s32 0, %v352
        %v354 = vrot.slane %v326, %v353
        %v355 = vlaneseq
        %v356 = vshrl.u32 %v355, 7
        %v357 = vsub.s32 0, %v356
        %v358 = vrot.slane %v328, %v357
        %v359 = vlaneseq
        %v360 = vshrl.u32 %v359, 7
        %v361 = vsub.s32 0, %v360
        %v362 = vrot.slane %v330, %v361
        %v371 = vmul.f32 %v334, %v280
        %v372 = vmul.f32 %v338, %v280
        %v373 = vmul.f32 %v342, %v280
        %v374 = vmul.f32 %v346, %v280
        %v375 = vmul.f32 %v350, %v280
        %v376 = vmul.f32 %v354, %v280
        %v377 = vmul.f32 %v358, %v280
        %v378 = vmul.f32 %v362, %v280
        %vm379 = vcmask 130048
        %v380 = vsel %vm379, %v371, 0.0
        %381 = vadd.xlane.f32.xlu0 %v380
        %v382 = vpop.xlane.xlu0 %381
        %v383 = vsel %vm379, %v372, 0.0
        %384 = vadd.xlane.f32.xlu0 %v383
        %v385 = vpop.xlane.xlu0 %384
        %v386 = vsel %vm379, %v373, 0.0
        %387 = vadd.xlane.f32.xlu0 %v386
        %v388 = vpop.xlane.xlu0 %387
        %v389 = vsel %vm379, %v374, 0.0
        %390 = vadd.xlane.f32.xlu0 %v389
        %v391 = vpop.xlane.xlu0 %390
        %v392 = vsel %vm379, %v375, 0.0
        %393 = vadd.xlane.f32.xlu0 %v392
        %v394 = vpop.xlane.xlu0 %393
        %v395 = vsel %vm379, %v376, 0.0
        %396 = vadd.xlane.f32.xlu0 %v395
        %v397 = vpop.xlane.xlu0 %396
        %v398 = vsel %vm379, %v377, 0.0
        %399 = vadd.xlane.f32.xlu0 %v398
        %v400 = vpop.xlane.xlu0 %399
        %v401 = vsel %vm379, %v378, 0.0
        %402 = vadd.xlane.f32.xlu0 %v401
        %v403 = vpop.xlane.xlu0 %402
        %v404 = vmul.f32 %v382, 0.25
        %v405 = vmul.f32 %v385, 0.25
        %v406 = vmul.f32 %v388, 0.25
        %v407 = vmul.f32 %v391, 0.25
        %v408 = vmul.f32 %v394, 0.25
        %v409 = vmul.f32 %v397, 0.25
        %v410 = vmul.f32 %v400, 0.25
        %v411 = vmul.f32 %v403, 0.25
        %v413 = vlaneseq
        %v414 = vshrl.u32 %v413, 7
        %v415 = vsub.s32 0, %v414
        %v416 = vrot.slane %v278, %v415
        %418 = vbcast.lane.b32.xlu0 %v416, 256
        %v419 = vpop.permute.xlu0 %418
        %v420 = vlaneseq
        %v421 = vshrl.u32 %v420, 7
        %v422 = vsub.s32 1, %v421
        %v423 = vrot.slane %v278, %v422
        %425 = vbcast.lane.b32.xlu0 %v423, 256
        %v426 = vpop.permute.xlu0 %425
        %v427 = vlaneseq
        %v428 = vshrl.u32 %v427, 7
        %v429 = vsub.s32 2, %v428
        %v430 = vrot.slane %v278, %v429
        %432 = vbcast.lane.b32.xlu0 %v430, 256
        %v433 = vpop.permute.xlu0 %432
        %v434 = vlaneseq
        %v435 = vshrl.u32 %v434, 7
        %v436 = vsub.s32 3, %v435
        %v437 = vrot.slane %v278, %v436
        %439 = vbcast.lane.b32.xlu0 %v437, 256
        %v440 = vpop.permute.xlu0 %439
        %v441 = vlaneseq
        %v442 = vshrl.u32 %v441, 7
        %v443 = vsub.s32 4, %v442
        %v444 = vrot.slane %v278, %v443
        %446 = vbcast.lane.b32.xlu0 %v444, 256
        %v447 = vpop.permute.xlu0 %446
        %v448 = vlaneseq
        %v449 = vshrl.u32 %v448, 7
        %v450 = vsub.s32 5, %v449
        %v451 = vrot.slane %v278, %v450
        %453 = vbcast.lane.b32.xlu0 %v451, 256
        %v454 = vpop.permute.xlu0 %453
        %v455 = vlaneseq
        %v456 = vshrl.u32 %v455, 7
        %v457 = vsub.s32 6, %v456
        %v458 = vrot.slane %v278, %v457
        %460 = vbcast.lane.b32.xlu0 %v458, 256
        %v461 = vpop.permute.xlu0 %460
        %v462 = vlaneseq
        %v463 = vshrl.u32 %v462, 7
        %v464 = vsub.s32 7, %v463
        %v465 = vrot.slane %v278, %v464
        %467 = vbcast.lane.b32.xlu0 %v465, 256
        %v468 = vpop.permute.xlu0 %467
        %v477 = vmul.f32 %v404, %v419
        %v478 = vmul.f32 %v405, %v426
        %v479 = vmul.f32 %v406, %v433
        %v480 = vmul.f32 %v407, %v440
        %v481 = vmul.f32 %v408, %v447
        %v482 = vmul.f32 %v409, %v454
        %v483 = vmul.f32 %v410, %v461
        %v484 = vmul.f32 %v411, %v468
        %493 = vset.pattern.permute.xlu0 0
        %494 = vperm.xlu0 %493, %v477
        %v495 = vpop.permute.xlu0 %494
        %496 = vset.pattern.permute.xlu0 0
        %497 = vperm.xlu0 %496, %v478
        %v498 = vpop.permute.xlu0 %497
        %499 = vset.pattern.permute.xlu0 0
        %500 = vperm.xlu0 %499, %v479
        %v501 = vpop.permute.xlu0 %500
        %502 = vset.pattern.permute.xlu0 0
        %503 = vperm.xlu0 %502, %v480
        %v504 = vpop.permute.xlu0 %503
        %505 = vset.pattern.permute.xlu0 0
        %506 = vperm.xlu0 %505, %v481
        %v507 = vpop.permute.xlu0 %506
        %508 = vset.pattern.permute.xlu0 0
        %509 = vperm.xlu0 %508, %v482
        %v510 = vpop.permute.xlu0 %509
        %511 = vset.pattern.permute.xlu0 0
        %512 = vperm.xlu0 %511, %v483
        %v513 = vpop.permute.xlu0 %512
        %514 = vset.pattern.permute.xlu0 0
        %515 = vperm.xlu0 %514, %v484
        %v516 = vpop.permute.xlu0 %515
        %v517 = vlaneseq
        %v518 = vshrl.u32 %v517, 7
        %v519 = vsub.s32 %v274, %v518
        %v520 = vrot.slane %v495, %v519
        %v521 = vlaneseq
        %v522 = vshrl.u32 %v521, 7
        %v523 = vsub.s32 %v274, %v522
        %v524 = vrot.slane %v498, %v523
        %v525 = vlaneseq
        %v526 = vshrl.u32 %v525, 7
        %v527 = vsub.s32 %v274, %v526
        %v528 = vrot.slane %v501, %v527
        %v529 = vlaneseq
        %v530 = vshrl.u32 %v529, 7
        %v531 = vsub.s32 %v274, %v530
        %v532 = vrot.slane %v504, %v531
        %v533 = vlaneseq
        %v534 = vshrl.u32 %v533, 7
        %v535 = vsub.s32 %v274, %v534
        %v536 = vrot.slane %v507, %v535
        %v537 = vlaneseq
        %v538 = vshrl.u32 %v537, 7
        %v539 = vsub.s32 %v274, %v538
        %v540 = vrot.slane %v510, %v539
        %v541 = vlaneseq
        %v542 = vshrl.u32 %v541, 7
        %v543 = vsub.s32 %v274, %v542
        %v544 = vrot.slane %v513, %v543
        %v545 = vlaneseq
        %v546 = vshrl.u32 %v545, 7
        %v547 = vsub.s32 %v274, %v546
        %v548 = vrot.slane %v516, %v547
        %vm549 = vcmask 1041409
        %v550 = vsel %vm549, %v524, %v520
        %vm551 = vcmask 1042434
        %v552 = vsel %vm551, %v528, %v550
        %vm553 = vcmask 1043459
        %v554 = vsel %vm553, %v532, %v552
        %vm555 = vcmask 1044484
        %v556 = vsel %vm555, %v536, %v554
        %vm557 = vcmask 1045509
        %v558 = vsel %vm557, %v540, %v556
        %vm559 = vcmask 1046534
        %v560 = vsel %vm559, %v544, %v558
        %vm561 = vcmask 1047559
        %v562 = vsel %vm561, %v548, %v560
        %vm564 = vcmask 64512
        %565 = vst.msk [vmem:[%s259] sm:$0xff] %vm564, %v562
        %566 = vst.msk [vmem:[%s266] sm:$0xff] %vm564, %v278
        %s567 = sand.u32 %s114, 1
        %s568 = scalar_lea.sflag [#allocation4], %s567
        %s569 = sand.u32 %s114, 1
        %s570 = smul.addr %s569, 8
        %s571 = scalar_lea.vmem [#allocation7], %s570
        %s572 = sand.u32 %s144, 1
        %s573 = scalar_lea.sflag [#allocation9], %s572
        %s574 = sand.u32 %s144, 1
        %s575 = smul.addr %s574, 8
        %s576 = scalar_lea.vmem [#allocation8], %s575
        // Predicated region
        $region37: #{tpu_custom_call.1} parent=27 // pred_check
          %p577 = pneg %p124
        $region38: #{tpu_custom_call.1} parent=27 // pred_check_branch
          %579 = sbr.rel (%p577) target = $region40
        $region39: #{tpu_custom_call.1} parent=27 // pred_region
          %s581 = ssub.s32 128, 128
          %582 = vsyncadd %s568, %s581
          %s583 = sadd.s32 %s34, %s33
          %s584 = sadd.s32 %s583, %s32
          %s585 = smul.addr %s584, 128
          %s586 = scalar_lea.hbm %s2, %s585
          %s588 = sshll.u32 %s571, 4
          %s589 = int_to_ptr.vmem [resolvable:$true] %s588
          %591 = dma.vmem_to_hbm [thread:$0]  %s589, 128, %s586, %s568
        $region40: #{tpu_custom_call.1} parent=27 // pred_fallthru
          _
        // Predicated region
        $region41: #{tpu_custom_call.1} parent=27 // pred_check
          %p592 = pneg %p154
        $region42: #{tpu_custom_call.1} parent=27 // pred_check_branch
          %594 = sbr.rel (%p592) target = $region44
        $region43: #{tpu_custom_call.1} parent=27 // pred_region
          %s596 = ssub.s32 128, 128
          %597 = vsyncadd %s573, %s596
          %s598 = sadd.s32 %s34, %s33
          %s599 = sadd.s32 %s598, %s32
          %s600 = smul.addr %s599, 128
          %s601 = scalar_lea.hbm %s3, %s600
          %s603 = sshll.u32 %s576, 4
          %s604 = int_to_ptr.vmem [resolvable:$true] %s603
          %606 = dma.vmem_to_hbm [thread:$0]  %s604, 128, %s601, %s573
        $region44: #{tpu_custom_call.1} parent=27 // pred_fallthru
          _
      $region28: #{tpu_custom_call.1} parent=5 // pred_fallthru
        _
      %p607 = scmp.le.s32.totalorder 2, %s22
      // Predicated region
      $region45: #{tpu_custom_call.1} parent=5 // pred_check
        %p608 = pneg %p607
      $region46: #{tpu_custom_call.1} parent=5 // pred_check_branch
        %610 = sbr.rel (%p608) target = $region48
      $region47: #{tpu_custom_call.1} parent=5 // pred_region
        %s611 = ssub.s32 %s22, 2
        // Predicated region
        $region49: #{tpu_custom_call.1} parent=47 // pred_check
          %p612 = pneg %p130
        $region50: #{tpu_custom_call.1} parent=47 // pred_check_branch
          %614 = sbr.rel (%p612) target = $region52
        $region51: #{tpu_custom_call.1} parent=47 // pred_region
          %s615 = sand.u32 %s115, 1
          %s616 = scalar_lea.sflag [#allocation4], %s615
          %s617 = sand.u32 %s115, 1
          %s618 = smul.addr %s617, 8
          %s619 = scalar_lea.vmem [#allocation7], %s618
          %620 = dma.done %s616, 128
        $region52: #{tpu_custom_call.1} parent=47 // pred_fallthru
          _
        // Predicated region
        $region53: #{tpu_custom_call.1} parent=47 // pred_check
          %p621 = pneg %p160
        $region54: #{tpu_custom_call.1} parent=47 // pred_check_branch
          %623 = sbr.rel (%p621) target = $region56
        $region55: #{tpu_custom_call.1} parent=47 // pred_region
          %s624 = sand.u32 %s145, 1
          %s625 = scalar_lea.sflag [#allocation9], %s624
          %s626 = sand.u32 %s145, 1
          %s627 = smul.addr %s626, 8
          %s628 = scalar_lea.vmem [#allocation8], %s627
          %629 = dma.done %s625, 128
        $region56: #{tpu_custom_call.1} parent=47 // pred_fallthru
          _
      $region48: #{tpu_custom_call.1} parent=5 // pred_fallthru
        _
    $region6: #{tpu_custom_call.1} parent=1 // loop_footer
      %s26 = sadd.s32 1, %s22
    $region7: #{tpu_custom_call.1} parent=1 // loop_footer_branch
      %21 = sbr.rel target = $region3
    $region8: #{tpu_custom_call.1} parent=1 // loop_exit
      _
    %630 = vsyncpa [#allocation3], 1
    %s631 = scalar_lea.sflag [#allocation3], 1
    %632 = vsyncpa %s631, 1
    %633 = vsyncpa [#allocation6], 1
    %s634 = scalar_lea.sflag [#allocation6], 1
    %635 = vsyncpa %s634, 1
    %636 = vsyncpa [#allocation4], 1
    %s637 = scalar_lea.sflag [#allocation4], 1
    %638 = vsyncpa %s637, 1
    %639 = vsyncpa [#allocation9], 1
    %s640 = scalar_lea.sflag [#allocation9], 1
    %641 = vsyncpa %s640, 1

</llo_original>
